<compile_context>
chip_gen: v5e
topology: v5e:2x2
jax: 0.10.0
libtpu: 0.0.40
codegen_flags: <defaults>
</compile_context>

<pallas_src>
import functools

import jax
import jax.numpy as jnp
from jax import lax
from jax.experimental import pallas as pl
from jax.experimental.pallas import tpu as pltpu


def _round_up(a: int, b: int) -> int:
    return -(-a // b) * b


def _make_tinynet_kernel(tile_n: int, chunk_n: int, use_bf16_mxu: bool):
    num_chunks = tile_n // chunk_n
    unroll = num_chunks if num_chunks <= 8 else 4

    def kernel(x_ref, w1_ref, b1_ref, w2_ref, b2_ref, w3_ref, b3_ref, o_ref):
        # Tiny weights/biases: loaded once per grid step, VMEM-resident across
        # steps (constant index_map).  W2 is only 4 vregs.
        w1 = w1_ref[...]          # (64, 1)
        b1 = b1_ref[...]          # (64, 1)
        w2 = w2_ref[...]          # (64, 64)
        b2 = b2_ref[...]          # (64, 1)
        w3 = w3_ref[...]          # (64, 1)  column form of PyTorch (1, 64)
        b3 = b3_ref[...]          # (1, 1)
        w2_mm = w2.astype(jnp.bfloat16) if use_bf16_mxu else w2

        # NOTE: the (64,1)->(64,chunk) lane-broadcasts of w1/b1/b2/w3 are left
        # implicit inside the loop body on purpose: hoisting them full-width
        # would pin ~64 vregs and defeat the chunking, while the VALU/XLU have
        # slack relative to the EUP (tanh) / MXU critical path.
        def body(c, carry):
            off = pl.multiple_of(c * chunk_n, chunk_n)
            xc = x_ref[:, pl.ds(off, chunk_n)]                        # (1, chunk)

            # Layer 1: in_features == 1 -> pure VPU broadcast multiply.
            h1 = jnp.tanh(w1 * xc + b1)                               # (64, chunk)

            # Layer 2: (64,64) @ (64,chunk) on the MXU, f32 accumulation.
            h1_mm = h1.astype(jnp.bfloat16) if use_bf16_mxu else h1
            h2 = jnp.tanh(
                jnp.dot(w2_mm, h1_mm, preferred_element_type=jnp.float32) + b2
            )                                                         # (64, chunk)

            # Layer 3: M=1 -> VPU multiply + sublane (XLU) reduce, not the MXU.
            y = jnp.sum(w3 * h2, axis=0, keepdims=True) + b3          # (1, chunk)

            o_ref[:, pl.ds(off, chunk_n)] = y.astype(o_ref.dtype)
            return carry

        lax.fori_loop(0, num_chunks, body, 0, unroll=unroll)

    return kernel


@functools.partial(jax.jit, static_argnames=("tile_n", "chunk_n", "use_bf16_mxu"))
def tinynet_forward(x, params, *, tile_n=16384, chunk_n=256, use_bf16_mxu=False):
    """x: (N, 1) float32. params: PyTorch-layout weights (out,in) and biases (out,)."""
    n = x.shape[0]
    lane = 128

    # ---- tile-size selection -------------------------------------------------
    n_lane_pad = _round_up(max(n, 1), lane)
    tile_n = min(tile_n, n_lane_pad)
    # v7x megacore: keep >=2 grid steps when the batch allows (no-op on v5e/v6e).
    if n_lane_pad >= 2 * lane:
        half = max(lane, (n_lane_pad // 2) // lane * lane)
        tile_n = min(tile_n, half)
    tile_n = max(lane, (tile_n // lane) * lane)
    # Inner chunk bounds vreg pressure (h1 + h2 chunks ~32 vregs at 256 lanes).
    chunk_n = max(lane, (min(chunk_n, tile_n) // lane) * lane)
    tile_n = _round_up(tile_n, chunk_n)

    n_pad = _round_up(n, tile_n)
    grid = (n_pad // tile_n,)

    # ---- lane-dense layout: batch -> lane axis --------------------------------
    xt = x.reshape(1, n)
    if n_pad != n:
        xt = jnp.pad(xt, ((0, 0), (0, n_pad - n)))

    # Weights in kernel layout (PyTorch (out,in) works directly feature-major).
    w1 = params["w1"]                    # (64, 1)
    b1 = params["b1"].reshape(64, 1)     # (64, 1)
    w2 = params["w2"]                    # (64, 64)
    b2 = params["b2"].reshape(64, 1)     # (64, 1)
    w3 = params["w3"].reshape(64, 1)     # (1, 64) -> column (64, 1)
    b3 = params["b3"].reshape(1, 1)      # (1, 1)

    batch_spec = pl.BlockSpec((1, tile_n), lambda i: (0, i))

    def const_spec(shape):
        # Same block every grid step -> stays resident in VMEM.
        return pl.BlockSpec(shape, lambda i: (0, 0))

    out = pl.pallas_call(
        _make_tinynet_kernel(tile_n, chunk_n, use_bf16_mxu),
        out_shape=jax.ShapeDtypeStruct((1, n_pad), x.dtype),
        grid=grid,
        in_specs=[
            batch_spec,
            const_spec(w1.shape), const_spec(b1.shape),
            const_spec(w2.shape), const_spec(b2.shape),
            const_spec(w3.shape), const_spec(b3.shape),
        ],
        out_specs=batch_spec,
        compiler_params=pltpu.CompilerParams(
            dimension_semantics=("parallel",),
        ),
    )(xt, w1, b1, w2, b2, w3, b3)

    # Back to PyTorch-shaped (N, 1) output, dropping padding lanes.
    return out[0, :n].reshape(n, 1)


def init_params(key):
    """Deterministic init matching nn.Linear defaults (U(-1/sqrt(fan_in), +...)).
    Weights in PyTorch layout (out_features, in_features); biases (out_features,)."""
    k1, k2, k3, k4, k5, k6 = jax.random.split(key, 6)

    def uniform(k, shape, fan_in):
        bound = 1.0 / jnp.sqrt(jnp.float32(fan_in))
        return jax.random.uniform(k, shape, jnp.float32, -bound, bound)

    return {
        "w1": uniform(k1, (64, 1), 1),
        "b1": uniform(k2, (64,), 1),
        "w2": uniform(k3, (64, 64), 64),
        "b2": uniform(k4, (64,), 64),
        "w3": uniform(k5, (1, 64), 64),
        "b3": uniform(k6, (1,), 64),
    }


def tinynet_reference(x, p):
    # PyTorch convention: y = x @ W.T + b
    h1 = jnp.tanh(x @ p["w1"].T + p["b1"])
    h2 = jnp.tanh(h1 @ p["w2"].T + p["b2"])
    return h2 @ p["w3"].T + p["b3"]


if __name__ == "__main__":
    key = jax.random.PRNGKey(0)
    pkey, xkey, xkey2 = jax.random.split(key, 3)

    params = init_params(pkey)

    # Small test, consistent with the module: batch=8, in_features=1.
    x = jax.random.normal(xkey, (8, 1), jnp.float32)
    out = jax.block_until_ready(tinynet_forward(x, params))
    ref = tinynet_reference(x, params)
    assert out.shape == (8, 1)
    assert jnp.allclose(out, ref, atol=1e-4, rtol=1e-4), float(jnp.max(jnp.abs(out - ref)))

    # Batch not a multiple of the tile -> exercises padding, a 2-step grid and
    # the multi-chunk inner loop (tile_n=512, chunk_n=256 after clamping).
    x2 = jax.random.normal(xkey2, (1000, 1), jnp.float32)
    out2 = jax.block_until_ready(tinynet_forward(x2, params))
    ref2 = tinynet_reference(x2, params)
    assert out2.shape == (1000, 1)
    assert jnp.allclose(out2, ref2, atol=1e-4, rtol=1e-4), float(jnp.max(jnp.abs(out2 - ref2)))

    # Optional bf16-MXU layer-2 path (f32 accumulation), looser tolerance.
    out3 = jax.block_until_ready(tinynet_forward(x2, params, use_bf16_mxu=True))
    assert jnp.allclose(out3, ref2, atol=2e-2, rtol=2e-2), float(jnp.max(jnp.abs(out3 - ref2)))

    print("KERNEL_OK")
</pallas_src>

<mosaic_0001>
module attributes {stable_mosaic.version = 11 : i64} {
  func.func @kernel(%arg0: i32, %arg1: memref<1x128xf32, #tpu.memory_space<vmem>>, %arg2: memref<64x1xf32, #tpu.memory_space<vmem>>, %arg3: memref<64x1xf32, #tpu.memory_space<vmem>>, %arg4: memref<64x64xf32, #tpu.memory_space<vmem>>, %arg5: memref<64x1xf32, #tpu.memory_space<vmem>>, %arg6: memref<64x1xf32, #tpu.memory_space<vmem>>, %arg7: memref<1x1xf32, #tpu.memory_space<vmem>>, %arg8: memref<1x128xf32, #tpu.memory_space<vmem>>) attributes {dimension_semantics = [#tpu.dimension_semantics<parallel>], iteration_bounds = array<i64: 1>, scalar_prefetch = 0 : i64, scratch_operands = 0 : i64, tpu.core_type = #tpu.core_type<tc>, window_params = [{transform_indices = @transform_0, window_bounds = array<i64: 1, 128>}, {pipeline_mode = #tpu.pipeline_mode<synchronous>, transform_indices = @transform_1, window_bounds = array<i64: 64, 1>}, {pipeline_mode = #tpu.pipeline_mode<synchronous>, transform_indices = @transform_2, window_bounds = array<i64: 64, 1>}, {pipeline_mode = #tpu.pipeline_mode<synchronous>, transform_indices = @transform_3, window_bounds = array<i64: 64, 64>}, {pipeline_mode = #tpu.pipeline_mode<synchronous>, transform_indices = @transform_4, window_bounds = array<i64: 64, 1>}, {pipeline_mode = #tpu.pipeline_mode<synchronous>, transform_indices = @transform_5, window_bounds = array<i64: 64, 1>}, {pipeline_mode = #tpu.pipeline_mode<synchronous>, transform_indices = @transform_6, window_bounds = array<i64: 1, 1>}, {transform_indices = @transform_7, window_bounds = array<i64: 1, 128>}]} {
    %c0 = arith.constant 0 : index
    %c0_0 = arith.constant 0 : index
    %0 = vector.load %arg2[%c0, %c0_0] : memref<64x1xf32, #tpu.memory_space<vmem>>, vector<64x1xf32>
    %c0_1 = arith.constant 0 : index
    %c0_2 = arith.constant 0 : index
    %1 = vector.load %arg3[%c0_1, %c0_2] : memref<64x1xf32, #tpu.memory_space<vmem>>, vector<64x1xf32>
    %c0_3 = arith.constant 0 : index
    %c0_4 = arith.constant 0 : index
    %2 = vector.load %arg4[%c0_3, %c0_4] : memref<64x64xf32, #tpu.memory_space<vmem>>, vector<64x64xf32>
    %c0_5 = arith.constant 0 : index
    %c0_6 = arith.constant 0 : index
    %3 = vector.load %arg5[%c0_5, %c0_6] : memref<64x1xf32, #tpu.memory_space<vmem>>, vector<64x1xf32>
    %c0_7 = arith.constant 0 : index
    %c0_8 = arith.constant 0 : index
    %4 = vector.load %arg6[%c0_7, %c0_8] : memref<64x1xf32, #tpu.memory_space<vmem>>, vector<64x1xf32>
    %c0_9 = arith.constant 0 : index
    %c0_10 = arith.constant 0 : index
    %5 = vector.load %arg7[%c0_9, %c0_10] : memref<1x1xf32, #tpu.memory_space<vmem>>, vector<1x1xf32>
    %c0_i32 = arith.constant 0 : i32
    %c128_i32 = arith.constant 128 : i32
    %6 = arith.muli %c0_i32, %c128_i32 : i32
    %7 = tpu.assume_multiple %6, 128 : i32
    %c0_11 = arith.constant 0 : index
    %8 = arith.index_cast %7 : i32 to index
    %9 = vector.load %arg1[%c0_11, %8] : memref<1x128xf32, #tpu.memory_space<vmem>>, vector<1x128xf32>
    %10 = vector.broadcast %0 : vector<64x1xf32> to vector<64x128xf32>
    %11 = vector.broadcast %9 : vector<1x128xf32> to vector<64x128xf32>
    %12 = arith.mulf %10, %11 : vector<64x128xf32>
    %13 = vector.broadcast %1 : vector<64x1xf32> to vector<64x128xf32>
    %14 = arith.addf %12, %13 : vector<64x128xf32>
    %15 = math.tanh %14 : vector<64x128xf32>
    %cst = arith.constant dense<0.000000e+00> : vector<64x128xf32>
    %16 = tpu.matmul %2, %15, %cst {dimension_numbers = #tpu.dot_dimension_numbers<[1], [0], [0], [1], [0, 0, 1, 1], [], []>} : vector<64x64xf32>, vector<64x128xf32>, vector<64x128xf32> -> vector<64x128xf32>
    %17 = vector.broadcast %3 : vector<64x1xf32> to vector<64x128xf32>
    %18 = arith.addf %16, %17 : vector<64x128xf32>
    %19 = math.tanh %18 : vector<64x128xf32>
    %20 = vector.broadcast %4 : vector<64x1xf32> to vector<64x128xf32>
    %21 = arith.mulf %20, %19 : vector<64x128xf32>
    %cst_12 = arith.constant dense<0.000000e+00> : vector<128xf32>
    %22 = vector.multi_reduction <add>, %21, %cst_12 [0] : vector<64x128xf32> to vector<128xf32>
    %23 = vector.shape_cast %22 : vector<128xf32> to vector<1x128xf32>
    %24 = vector.broadcast %5 : vector<1x1xf32> to vector<1x128xf32>
    %25 = arith.addf %23, %24 : vector<1x128xf32>
    %c0_13 = arith.constant 0 : index
    %26 = arith.index_cast %7 : i32 to index
    %27 = vector.load %arg8[%c0_13, %26] : memref<1x128xf32, #tpu.memory_space<vmem>>, vector<1x128xf32>
    tpu.vector_store %arg8[%c0_13, %26], %25 {strides = array<i32>} : memref<1x128xf32, #tpu.memory_space<vmem>>, vector<1x128xf32>,
    %c1_i32 = arith.constant 1 : i32
    return
  }
  func.func @transform_0(%arg0: i32) -> (i32, i32) {
    %c0_i32 = arith.constant 0 : i32
    %c0_i32_0 = arith.constant 0 : i32
    return %c0_i32, %arg0 : i32, i32
  }
  func.func @transform_1(%arg0: i32) -> (i32, i32) {
    %c0_i32 = arith.constant 0 : i32
    %c0_i32_0 = arith.constant 0 : i32
    %c0_i32_1 = arith.constant 0 : i32
    return %c0_i32, %c0_i32_0 : i32, i32
  }
  func.func @transform_2(%arg0: i32) -> (i32, i32) {
    %c0_i32 = arith.constant 0 : i32
    %c0_i32_0 = arith.constant 0 : i32
    %c0_i32_1 = arith.constant 0 : i32
    return %c0_i32, %c0_i32_0 : i32, i32
  }
  func.func @transform_3(%arg0: i32) -> (i32, i32) {
    %c0_i32 = arith.constant 0 : i32
    %c0_i32_0 = arith.constant 0 : i32
    %c0_i32_1 = arith.constant 0 : i32
    return %c0_i32, %c0_i32_0 : i32, i32
  }
  func.func @transform_4(%arg0: i32) -> (i32, i32) {
    %c0_i32 = arith.constant 0 : i32
    %c0_i32_0 = arith.constant 0 : i32
    %c0_i32_1 = arith.constant 0 : i32
    return %c0_i32, %c0_i32_0 : i32, i32
  }
  func.func @transform_5(%arg0: i32) -> (i32, i32) {
    %c0_i32 = arith.constant 0 : i32
    %c0_i32_0 = arith.constant 0 : i32
    %c0_i32_1 = arith.constant 0 : i32
    return %c0_i32, %c0_i32_0 : i32, i32
  }
  func.func @transform_6(%arg0: i32) -> (i32, i32) {
    %c0_i32 = arith.constant 0 : i32
    %c0_i32_0 = arith.constant 0 : i32
    %c0_i32_1 = arith.constant 0 : i32
    return %c0_i32, %c0_i32_0 : i32, i32
  }
  func.func @transform_7(%arg0: i32) -> (i32, i32) {
    %c0_i32 = arith.constant 0 : i32
    %c0_i32_0 = arith.constant 0 : i32
    return %c0_i32, %arg0 : i32, i32
  }
}

</mosaic_0001>

<llo_original>
// kernel: tinynet_forward.1
$region0: #{tinynet_forward.1}
  #allocation0 [shape = 'u32[]', space=smem, size = 0x4, offset = 0x4, fixed_abs, tag = 'smem constant byte address 0x4 - core index']
  #allocation1 [shape = 'u32[72,128]{1,0:T(1,128)}', space=vmem, size = 0x9000, scoped, tag = 'internal scratch']
  #allocation2 [shape = 'f32[1,1]{1,0:T(1,128)S(1)}', space=vmem, size = 0x200, scoped, tag = 'scoped memory for tinynet_forward.1']
  %s0 = inlined_call_operand.vmem [shape: f32[1,128], index: 0, kind: input, shape index: {}]
  %s1 = inlined_call_operand.vmem [shape: f32[64,1], index: 1, kind: input, shape index: {}]
  %s2 = inlined_call_operand.vmem [shape: f32[64,1], index: 2, kind: input, shape index: {}]
  %s3 = inlined_call_operand.vmem [shape: f32[64,64], index: 3, kind: input, shape index: {}]
  %s4 = inlined_call_operand.vmem [shape: f32[64,1], index: 4, kind: input, shape index: {}]
  %s5 = inlined_call_operand.vmem [shape: f32[64,1], index: 5, kind: input, shape index: {}]
  %s6 = inlined_call_operand.<no memory space> [shape: f32[1,1], index: 6, kind: input, shape index: {}]
  %s7 = inlined_call_operand.vmem [shape: f32[1,128], index: 7, kind: output, shape index: {}]
  %s8 = sld [smem:[#allocation0]]
  $region38: #{tinynet_forward.1} parent=0
    _
  %s10 = ssub.s32 1, %s8
  %s11 = scalar_select 0, %s10, %s8
  %v12 = vstv %s6
  %13 = vst [vmem:[#allocation2] sm:$0x1] %v12
  // Predicated region
  $region2: #{tinynet_forward.1} parent=0 // pred_check
    _
  $region3: #{tinynet_forward.1} parent=0 // pred_check_branch
    %15 = sbr.rel (0) target = $region5
  $region4: #{tinynet_forward.1} parent=0 // pred_region
    _
  $region5: #{tinynet_forward.1} parent=0 // pred_fallthru
    _
  // Predicated region
  $region6: #{tinynet_forward.1} parent=0 // pred_check
    _
  $region7: #{tinynet_forward.1} parent=0 // pred_check_branch
    %17 = sbr.rel (0) target = $region9
  $region8: #{tinynet_forward.1} parent=0 // pred_region
    _
  $region9: #{tinynet_forward.1} parent=0 // pred_fallthru
    _
  // Predicated region
  $region10: #{tinynet_forward.1} parent=0 // pred_check
    _
  $region11: #{tinynet_forward.1} parent=0 // pred_check_branch
    %19 = sbr.rel (0) target = $region13
  $region12: #{tinynet_forward.1} parent=0 // pred_region
    _
  $region13: #{tinynet_forward.1} parent=0 // pred_fallthru
    _
  // Predicated region
  $region14: #{tinynet_forward.1} parent=0 // pred_check
    _
  $region15: #{tinynet_forward.1} parent=0 // pred_check_branch
    %21 = sbr.rel (0) target = $region17
  $region16: #{tinynet_forward.1} parent=0 // pred_region
    _
  $region17: #{tinynet_forward.1} parent=0 // pred_fallthru
    _
  // Predicated region
  $region18: #{tinynet_forward.1} parent=0 // pred_check
    _
  $region19: #{tinynet_forward.1} parent=0 // pred_check_branch
    %23 = sbr.rel (0) target = $region21
  $region20: #{tinynet_forward.1} parent=0 // pred_region
    _
  $region21: #{tinynet_forward.1} parent=0 // pred_fallthru
    _
  // Predicated region
  $region22: #{tinynet_forward.1} parent=0 // pred_check
    _
  $region23: #{tinynet_forward.1} parent=0 // pred_check_branch
    %25 = sbr.rel (0) target = $region25
  $region24: #{tinynet_forward.1} parent=0 // pred_region
    _
  $region25: #{tinynet_forward.1} parent=0 // pred_fallthru
    _
  // Predicated region
  $region26: #{tinynet_forward.1} parent=0 // pred_check
    _
  $region27: #{tinynet_forward.1} parent=0 // pred_check_branch
    %27 = sbr.rel (0) target = $region29
  $region28: #{tinynet_forward.1} parent=0 // pred_region
    _
  $region29: #{tinynet_forward.1} parent=0 // pred_fallthru
    _
  %v28 = vld [vmem:[%s1] sm:$0xff]
  %v29 = vld [vmem:[%s1 + $0x8] sm:$0xff]
  %v30 = vld [vmem:[%s1 + $0x10] sm:$0xff]
  %v31 = vld [vmem:[%s1 + $0x18] sm:$0xff]
  %v32 = vld [vmem:[%s1 + $0x20] sm:$0xff]
  %v33 = vld [vmem:[%s1 + $0x28] sm:$0xff]
  %v34 = vld [vmem:[%s1 + $0x30] sm:$0xff]
  %v35 = vld [vmem:[%s1 + $0x38] sm:$0xff]
  %v36 = vld [vmem:[%s2] sm:$0xff]
  %v37 = vld [vmem:[%s2 + $0x8] sm:$0xff]
  %v38 = vld [vmem:[%s2 + $0x10] sm:$0xff]
  %v39 = vld [vmem:[%s2 + $0x18] sm:$0xff]
  %v40 = vld [vmem:[%s2 + $0x20] sm:$0xff]
  %v41 = vld [vmem:[%s2 + $0x28] sm:$0xff]
  %v42 = vld [vmem:[%s2 + $0x30] sm:$0xff]
  %v43 = vld [vmem:[%s2 + $0x38] sm:$0xff]
  %v44 = vld [vmem:[%s3] sm:$0xff]
  %v45 = vld [vmem:[%s3 + $0x8] sm:$0xff]
  %v46 = vld [vmem:[%s3 + $0x10] sm:$0xff]
  %v47 = vld [vmem:[%s3 + $0x18] sm:$0xff]
  %v48 = vld [vmem:[%s3 + $0x20] sm:$0xff]
  %v49 = vld [vmem:[%s3 + $0x28] sm:$0xff]
  %v50 = vld [vmem:[%s3 + $0x30] sm:$0xff]
  %v51 = vld [vmem:[%s3 + $0x38] sm:$0xff]
  %v52 = vld [vmem:[%s4] sm:$0xff]
  %v53 = vld [vmem:[%s4 + $0x8] sm:$0xff]
  %v54 = vld [vmem:[%s4 + $0x10] sm:$0xff]
  %v55 = vld [vmem:[%s4 + $0x18] sm:$0xff]
  %v56 = vld [vmem:[%s4 + $0x20] sm:$0xff]
  %v57 = vld [vmem:[%s4 + $0x28] sm:$0xff]
  %v58 = vld [vmem:[%s4 + $0x30] sm:$0xff]
  %v59 = vld [vmem:[%s4 + $0x38] sm:$0xff]
  %v60 = vld [vmem:[%s5] sm:$0xff]
  %v61 = vld [vmem:[%s5 + $0x8] sm:$0xff]
  %v62 = vld [vmem:[%s5 + $0x10] sm:$0xff]
  %v63 = vld [vmem:[%s5 + $0x18] sm:$0xff]
  %v64 = vld [vmem:[%s5 + $0x20] sm:$0xff]
  %v65 = vld [vmem:[%s5 + $0x28] sm:$0xff]
  %v66 = vld [vmem:[%s5 + $0x30] sm:$0xff]
  %v67 = vld [vmem:[%s5 + $0x38] sm:$0xff]
  %v68 = vld [vmem:[#allocation2] sm:$0x1]
  %v69 = vld [vmem:[%s0] sm:$0x1]
  %71 = vset.pattern.permute.xlu0 0
  %72 = vperm.xlu0 %71, %v28
  %v73 = vpop.permute.xlu0 %72
  %76 = vset.pattern.permute.xlu0 0
  %77 = vperm.xlu0 %76, %v29
  %v78 = vpop.permute.xlu0 %77
  %81 = vset.pattern.permute.xlu0 0
  %82 = vperm.xlu0 %81, %v30
  %v83 = vpop.permute.xlu0 %82
  %86 = vset.pattern.permute.xlu0 0
  %87 = vperm.xlu0 %86, %v31
  %v88 = vpop.permute.xlu0 %87
  %91 = vset.pattern.permute.xlu0 0
  %92 = vperm.xlu0 %91, %v32
  %v93 = vpop.permute.xlu0 %92
  %96 = vset.pattern.permute.xlu0 0
  %97 = vperm.xlu0 %96, %v33
  %v98 = vpop.permute.xlu0 %97
  %101 = vset.pattern.permute.xlu0 0
  %102 = vperm.xlu0 %101, %v34
  %v103 = vpop.permute.xlu0 %102
  %106 = vset.pattern.permute.xlu0 0
  %107 = vperm.xlu0 %106, %v35
  %v108 = vpop.permute.xlu0 %107
  %v111 = vperm.slane %v69, 0
  %v113 = vmul.f32 %v73, %v111
  %v114 = vmul.f32 %v78, %v111
  %v115 = vmul.f32 %v83, %v111
  %v116 = vmul.f32 %v88, %v111
  %v117 = vmul.f32 %v93, %v111
  %v118 = vmul.f32 %v98, %v111
  %v119 = vmul.f32 %v103, %v111
  %v120 = vmul.f32 %v108, %v111
  %122 = vset.pattern.permute.xlu0 0
  %123 = vperm.xlu0 %122, %v36
  %v124 = vpop.permute.xlu0 %123
  %127 = vset.pattern.permute.xlu0 0
  %128 = vperm.xlu0 %127, %v37
  %v129 = vpop.permute.xlu0 %128
  %132 = vset.pattern.permute.xlu0 0
  %133 = vperm.xlu0 %132, %v38
  %v134 = vpop.permute.xlu0 %133
  %137 = vset.pattern.permute.xlu0 0
  %138 = vperm.xlu0 %137, %v39
  %v139 = vpop.permute.xlu0 %138
  %142 = vset.pattern.permute.xlu0 0
  %143 = vperm.xlu0 %142, %v40
  %v144 = vpop.permute.xlu0 %143
  %147 = vset.pattern.permute.xlu0 0
  %148 = vperm.xlu0 %147, %v41
  %v149 = vpop.permute.xlu0 %148
  %152 = vset.pattern.permute.xlu0 0
  %153 = vperm.xlu0 %152, %v42
  %v154 = vpop.permute.xlu0 %153
  %157 = vset.pattern.permute.xlu0 0
  %158 = vperm.xlu0 %157, %v43
  %v159 = vpop.permute.xlu0 %158
  %v161 = vadd.f32 %v113, %v124
  %v162 = vadd.f32 %v114, %v129
  %v163 = vadd.f32 %v115, %v134
  %v164 = vadd.f32 %v116, %v139
  %v165 = vadd.f32 %v117, %v144
  %v166 = vadd.f32 %v118, %v149
  %v167 = vadd.f32 %v119, %v154
  %v168 = vadd.f32 %v120, %v159
  %v169 = vtanh.pop %v161
  %v170 = vtanh.pop %v162
  %v171 = vtanh.pop %v163
  %v172 = vtanh.pop %v164
  %v173 = vtanh.pop %v165
  %v174 = vtanh.pop %v166
  %v175 = vtanh.pop %v167
  %v176 = vtanh.pop %v168
  %178 = vset.pattern.permute.xlu0 0
  %179 = vperm.xlu0 %178, %v52
  %v180 = vpop.permute.xlu0 %179
  %183 = vset.pattern.permute.xlu0 0
  %184 = vperm.xlu0 %183, %v53
  %v185 = vpop.permute.xlu0 %184
  %188 = vset.pattern.permute.xlu0 0
  %189 = vperm.xlu0 %188, %v54
  %v190 = vpop.permute.xlu0 %189
  %193 = vset.pattern.permute.xlu0 0
  %194 = vperm.xlu0 %193, %v55
  %v195 = vpop.permute.xlu0 %194
  %198 = vset.pattern.permute.xlu0 0
  %199 = vperm.xlu0 %198, %v56
  %v200 = vpop.permute.xlu0 %199
  %203 = vset.pattern.permute.xlu0 0
  %204 = vperm.xlu0 %203, %v57
  %v205 = vpop.permute.xlu0 %204
  %208 = vset.pattern.permute.xlu0 0
  %209 = vperm.xlu0 %208, %v58
  %v210 = vpop.permute.xlu0 %209
  %213 = vset.pattern.permute.xlu0 0
  %214 = vperm.xlu0 %213, %v59
  %v215 = vpop.permute.xlu0 %214
  %vm217 = vcmask 523264
  %v219 = vsel %vm217, %v44, 0
  %v222 = vsel %vm217, %v45, 0
  %v225 = vsel %vm217, %v46, 0
  %v228 = vsel %vm217, %v47, 0
  %v231 = vsel %vm217, %v48, 0
  %v234 = vsel %vm217, %v49, 0
  %v237 = vsel %vm217, %v50, 0
  %v240 = vsel %vm217, %v51, 0
  %242 = vmatpush.msra.mxu0 0.0
  %243 = vmatpush.msra.mxu0 0.0
  %244 = vmatpush.msra.mxu0 0.0
  %245 = vmatpush.msra.mxu0 0.0
  %246 = vmatpush.msra.mxu0 0.0
  %247 = vmatpush.msra.mxu0 0.0
  %248 = vmatpush.msra.mxu0 0.0
  %249 = vmatpush.msra.mxu0 0.0
  %250 = vmatpush.msra.mxu0 %v176
  %251 = vmatpush.msra.mxu0 %v175
  %252 = vmatpush.msra.mxu0 %v174
  %253 = vmatpush.msra.mxu0 %v173
  %254 = vmatpush.msra.mxu0 %v172
  %255 = vmatpush.msra.mxu0 %v171
  %256 = vmatpush.msra.mxu0 %v170
  %257 = vmatpush.msra.mxu0 %v169
  %258 = vmatmul.f32.gmra.mxu0 %v219
  %v259 = vpop.f32.mrf.mxu0
  %v260 = vadd.f32 %v180, %v259
  %261 = vmatmul.f32.gmra.mxu0 %v222
  %v262 = vpop.f32.mrf.mxu0
  %v263 = vadd.f32 %v185, %v262
  %264 = vmatmul.f32.gmra.mxu0 %v225
  %v265 = vpop.f32.mrf.mxu0
  %v266 = vadd.f32 %v190, %v265
  %267 = vmatmul.f32.gmra.mxu0 %v228
  %v268 = vpop.f32.mrf.mxu0
  %v269 = vadd.f32 %v195, %v268
  %270 = vmatmul.f32.gmra.mxu0 %v231
  %v271 = vpop.f32.mrf.mxu0
  %v272 = vadd.f32 %v200, %v271
  %273 = vmatmul.f32.gmra.mxu0 %v234
  %v274 = vpop.f32.mrf.mxu0
  %v275 = vadd.f32 %v205, %v274
  %276 = vmatmul.f32.gmra.mxu0 %v237
  %v277 = vpop.f32.mrf.mxu0
  %v278 = vadd.f32 %v210, %v277
  %279 = vmatmul.f32.gmra.mxu0 %v240
  %v280 = vpop.f32.mrf.mxu0
  %v281 = vadd.f32 %v215, %v280
  %282 = vdwg.mxu0
  %v283 = vtanh.pop %v260
  %v284 = vtanh.pop %v263
  %v285 = vtanh.pop %v266
  %v286 = vtanh.pop %v269
  %v287 = vtanh.pop %v272
  %v288 = vtanh.pop %v275
  %v289 = vtanh.pop %v278
  %v290 = vtanh.pop %v281
  %292 = vset.pattern.permute.xlu0 0
  %293 = vperm.xlu0 %292, %v60
  %v294 = vpop.permute.xlu0 %293
  %297 = vset.pattern.permute.xlu0 0
  %298 = vperm.xlu0 %297, %v61
  %v299 = vpop.permute.xlu0 %298
  %302 = vset.pattern.permute.xlu0 0
  %303 = vperm.xlu0 %302, %v62
  %v304 = vpop.permute.xlu0 %303
  %307 = vset.pattern.permute.xlu0 0
  %308 = vperm.xlu0 %307, %v63
  %v309 = vpop.permute.xlu0 %308
  %312 = vset.pattern.permute.xlu0 0
  %313 = vperm.xlu0 %312, %v64
  %v314 = vpop.permute.xlu0 %313
  %317 = vset.pattern.permute.xlu0 0
  %318 = vperm.xlu0 %317, %v65
  %v319 = vpop.permute.xlu0 %318
  %322 = vset.pattern.permute.xlu0 0
  %323 = vperm.xlu0 %322, %v66
  %v324 = vpop.permute.xlu0 %323
  %327 = vset.pattern.permute.xlu0 0
  %328 = vperm.xlu0 %327, %v67
  %v329 = vpop.permute.xlu0 %328
  %v331 = vmul.f32 %v294, %v283
  %v332 = vmul.f32 %v299, %v284
  %v333 = vmul.f32 %v304, %v285
  %v334 = vmul.f32 %v309, %v286
  %v335 = vmul.f32 %v314, %v287
  %v336 = vmul.f32 %v319, %v288
  %v337 = vmul.f32 %v324, %v289
  %v338 = vmul.f32 %v329, %v290
  %v339 = vadd.f32 %v331, %v332
  %v340 = vadd.f32 %v339, %v333
  %v341 = vadd.f32 %v340, %v334
  %v342 = vadd.f32 %v341, %v335
  %v343 = vadd.f32 %v342, %v336
  %v344 = vadd.f32 %v343, %v337
  %v345 = vadd.f32 %v344, %v338
  %v346 = vrot.slane %v345, 4
  %v347 = vadd.f32 %v345, %v346
  %v348 = vrot.slane %v347, 2
  %v349 = vadd.f32 %v347, %v348
  %v350 = vrot.slane %v349, 1
  %v351 = vadd.f32 %v349, %v350
  %353 = vset.pattern.permute.xlu0 0
  %354 = vperm.xlu0 %353, %v68
  %v355 = vpop.permute.xlu0 %354
  %v357 = vperm.slane %v355, 0
  %v358 = vadd.f32 %v351, %v357
  %359 = vst [vmem:[%s7] sm:$0x1] %v358
  // Predicated region
  $region30: #{tinynet_forward.1} parent=0 // pred_check
    _
  $region31: #{tinynet_forward.1} parent=0 // pred_check_branch
    %361 = sbr.rel (0) target = $region33
  $region32: #{tinynet_forward.1} parent=0 // pred_region
    _
  $region33: #{tinynet_forward.1} parent=0 // pred_fallthru
    _
  // Predicated region
  $region34: #{tinynet_forward.1} parent=0 // pred_check
    _
  $region35: #{tinynet_forward.1} parent=0 // pred_check_branch
    %363 = sbr.rel (0) target = $region37
  $region36: #{tinynet_forward.1} parent=0 // pred_region
    _
  $region37: #{tinynet_forward.1} parent=0 // pred_fallthru
    _

</llo_original>
